<compile_context>
chip_gen: v7x
topology: tpu7x:2x2x1
jax: 0.10.0
libtpu: 0.0.40
codegen_flags: <defaults>
</compile_context>

<pallas_src>
import functools

import jax
import jax.numpy as jnp
import numpy as np
from jax.experimental import pallas as pl
from jax.experimental.pallas import tpu as pltpu


def _round_up(x, m):
    return ((x + m - 1) // m) * m


def _global_avg_pool_kernel(x_ref, o_ref, acc_ref, *, inv_len):
    k = pl.program_id(1)

    @pl.when(k == 0)
    def _():
        acc_ref[...] = jnp.zeros_like(acc_ref)

    # Row-wise partial sum of this (tm, tl) block, accumulated in f32.
    acc_ref[...] += jnp.sum(x_ref[...].astype(jnp.float32), axis=1, keepdims=True)

    @pl.when(k == pl.num_programs(1) - 1)
    def _():
        o_ref[...] = (acc_ref[...] * inv_len).astype(o_ref.dtype)


def global_pooling_1d(x, *, max_tm=256, max_tl=2048):
    """x: (N, C, L) -> (N, C), mean over the last axis (PyTorch dim=2)."""
    N, C, L = x.shape
    M = N * C
    x2d = x.reshape(M, L)

    # Row tile: a multiple of 8 sublanes (or the full padded row extent).
    Mp = _round_up(M, 8)
    tm = min(max_tm, Mp)
    Mp = _round_up(Mp, tm)

    # Length tile: whole L in one block when it fits, otherwise 128-lane
    # multiples with zero padding (zeros do not perturb the sum).
    if L <= max_tl:
        tl, Lp = L, L
    else:
        tl = max_tl
        Lp = _round_up(L, tl)

    if (Mp, Lp) != (M, L):
        x2d = jnp.pad(x2d, ((0, Mp - M), (0, Lp - L)))

    kernel = functools.partial(_global_avg_pool_kernel, inv_len=1.0 / L)
    out = pl.pallas_call(
        kernel,
        out_shape=jax.ShapeDtypeStruct((Mp, 1), jnp.float32),
        grid_spec=pltpu.PrefetchScalarGridSpec(
            num_scalar_prefetch=0,
            grid=(Mp // tm, Lp // tl),
            in_specs=[pl.BlockSpec((tm, tl), lambda i, k: (i, k))],
            out_specs=pl.BlockSpec((tm, 1), lambda i, k: (i, 0)),
            scratch_shapes=[pltpu.VMEM((tm, 1), jnp.float32)],
        ),
        compiler_params=pltpu.CompilerParams(
            dimension_semantics=("parallel", "arbitrary")),
    )(x2d)

    return out[:M, 0].reshape(N, C).astype(x.dtype)


if __name__ == "__main__":
    # Small shapes consistent with the module: batch=2, channels=4, length=16.
    N, C, L = 2, 4, 16
    x = jax.random.normal(jax.random.PRNGKey(0), (N, C, L), dtype=jnp.float32)

    out = jax.block_until_ready(global_pooling_1d(x))
    ref = jax.block_until_ready(jnp.mean(x, axis=2))
    np.testing.assert_allclose(np.asarray(out), np.asarray(ref), rtol=1e-6, atol=1e-6)
    assert out.shape == (N, C)

    # Second check exercising the tiled-reduction path (L > one block) and
    # row/length padding.
    x2 = jax.random.normal(jax.random.PRNGKey(1), (3, 5, 3000), dtype=jnp.float32)
    out2 = jax.block_until_ready(global_pooling_1d(x2))
    ref2 = jax.block_until_ready(jnp.mean(x2, axis=2))
    np.testing.assert_allclose(np.asarray(out2), np.asarray(ref2), rtol=1e-5, atol=1e-5)
    assert out2.shape == (3, 5)

    print("KERNEL_OK")
</pallas_src>

<mosaic_0001>
module attributes {stable_mosaic.version = 11 : i64} {
  func.func @_global_avg_pool_kernel(%arg0: i32, %arg1: i32, %arg2: memref<8x16xf32, #tpu.memory_space<vmem>>, %arg3: memref<8x1xf32, #tpu.memory_space<vmem>>, %arg4: memref<8x1xf32, #tpu.memory_space<vmem>>) attributes {dimension_semantics = [#tpu.dimension_semantics<parallel>, #tpu.dimension_semantics<arbitrary>], iteration_bounds = array<i64: 1, 1>, scalar_prefetch = 0 : i64, scratch_operands = 1 : i64, tpu.core_type = #tpu.core_type<tc>, window_params = [{transform_indices = @transform_0, window_bounds = array<i64: 8, 16>}, {transform_indices = @transform_1, window_bounds = array<i64: 8, 1>}]} {
    %c0_i32 = arith.constant 0 : i32
    %0 = arith.cmpi eq, %arg1, %c0_i32 : i32
    %1 = arith.extui %0 : i1 to i32
    %c0_i32_0 = arith.constant 0 : i32
    %2 = arith.cmpi ne, %1, %c0_i32_0 : i32
    scf.if %2 {
      %cst_8 = arith.constant 0.000000e+00 : f32
      %12 = vector.broadcast %cst_8 : f32 to vector<8x1xf32>
      %c0_9 = arith.constant 0 : index
      %c0_10 = arith.constant 0 : index
      %13 = vector.load %arg4[%c0_9, %c0_10] : memref<8x1xf32, #tpu.memory_space<vmem>>, vector<8x1xf32>
      tpu.vector_store %arg4[%c0_9, %c0_10], %12 {strides = array<i32>} : memref<8x1xf32, #tpu.memory_space<vmem>>, vector<8x1xf32>,
    } else {
    }
    %c0 = arith.constant 0 : index
    %c0_1 = arith.constant 0 : index
    %3 = vector.load %arg4[%c0, %c0_1] : memref<8x1xf32, #tpu.memory_space<vmem>>, vector<8x1xf32>
    %c0_2 = arith.constant 0 : index
    %c0_3 = arith.constant 0 : index
    %4 = vector.load %arg2[%c0_2, %c0_3] : memref<8x16xf32, #tpu.memory_space<vmem>>, vector<8x16xf32>
    %cst = arith.constant dense<0.000000e+00> : vector<8xf32>
    %5 = vector.multi_reduction <add>, %4, %cst [1] : vector<8x16xf32> to vector<8xf32>
    %6 = vector.shape_cast %5 : vector<8xf32> to vector<8x1xf32>
    %7 = arith.addf %3, %6 : vector<8x1xf32>
    %c0_4 = arith.constant 0 : index
    %c0_5 = arith.constant 0 : index
    %8 = vector.load %arg4[%c0_4, %c0_5] : memref<8x1xf32, #tpu.memory_space<vmem>>, vector<8x1xf32>
    tpu.vector_store %arg4[%c0_4, %c0_5], %7 {strides = array<i32>} : memref<8x1xf32, #tpu.memory_space<vmem>>, vector<8x1xf32>,
    %c0_i32_6 = arith.constant 0 : i32
    %9 = arith.cmpi eq, %arg1, %c0_i32_6 : i32
    %10 = arith.extui %9 : i1 to i32
    %c0_i32_7 = arith.constant 0 : i32
    %11 = arith.cmpi ne, %10, %c0_i32_7 : i32
    scf.if %11 {
      %c0_8 = arith.constant 0 : index
      %c0_9 = arith.constant 0 : index
      %12 = vector.load %arg4[%c0_8, %c0_9] : memref<8x1xf32, #tpu.memory_space<vmem>>, vector<8x1xf32>
      %cst_10 = arith.constant 6.250000e-02 : f32
      %13 = vector.broadcast %cst_10 : f32 to vector<8x1xf32>
      %14 = arith.mulf %12, %13 : vector<8x1xf32>
      %c0_11 = arith.constant 0 : index
      %c0_12 = arith.constant 0 : index
      %15 = vector.load %arg3[%c0_11, %c0_12] : memref<8x1xf32, #tpu.memory_space<vmem>>, vector<8x1xf32>
      tpu.vector_store %arg3[%c0_11, %c0_12], %14 {strides = array<i32>} : memref<8x1xf32, #tpu.memory_space<vmem>>, vector<8x1xf32>,
    } else {
    }
    return
  }
  func.func @transform_0(%arg0: i32, %arg1: i32) -> (i32, i32) {
    %c0_i32 = arith.constant 0 : i32
    return %arg0, %arg1 : i32, i32
  }
  func.func @transform_1(%arg0: i32, %arg1: i32) -> (i32, i32) {
    %c0_i32 = arith.constant 0 : i32
    %c0_i32_0 = arith.constant 0 : i32
    return %arg0, %c0_i32 : i32, i32
  }
}

</mosaic_0001>

<llo_original>
// kernel: tpu_custom_call.1
$region0: #{tpu_custom_call.1}
  #allocation0 [shape = 'u32[]', space=smem, size = 0x4, offset = 0x4, fixed_abs, tag = 'smem constant byte address 0x4 - core index']
  #allocation1 [shape = 'u32[144,128]{1,0:T(1,128)}', space=vmem, size = 0x12000, scoped, tag = 'internal scratch']
  #allocation2 [shape = 'f32[8,1]{1,0:T(8,128)}', space=vmem, size = 0x1000, scoped, tag = 'scratch operand']
  %s0 = inlined_call_operand.hbm [shape: f32[8,16], index: 0, kind: input, shape index: {}]
  %s1 = inlined_call_operand.vmem [shape: f32[8,1], index: 1, kind: output, shape index: {}]
  %s2 = sld [smem:[#allocation0]]
  $region26: #{tpu_custom_call.1} parent=0
    _
  %s4 = ssub.s32 1, %s2
  %s5 = scalar_select 0, %s4, %s2
  $region1: #{tpu_custom_call.1} parent=0
    #allocation3 [shape = 'u8[4096]{0}', space=vmem, size = 0x1000, scoped, tag = 'input window, operand 0, single buffered']
    #allocation4 [shape = 's32[1]{0}', space=sflag, size = 0x4, scoped, tag = 'scoped memory for tpu_custom_call.1']
    %6 = vsyncpa [#allocation4], 0
    // Predicated region
    $region2: #{tpu_custom_call.1} parent=1 // pred_check
      _
    $region3: #{tpu_custom_call.1} parent=1 // pred_check_branch
      %8 = sbr.rel (0) target = $region5
    $region4: #{tpu_custom_call.1} parent=1 // pred_region
      %s10 = ssub.s32 128, 128
      %11 = vsyncadd [#allocation4], %s10
      %s13 = sshll.u32 [#allocation3], 4
      %s14 = int_to_ptr.vmem [resolvable:$true] %s13
      %16 = dma.hbm_to_vmem [thread:$0]  %s0, 128, %s14, [#allocation4]
    $region5: #{tpu_custom_call.1} parent=1 // pred_fallthru
      _
    // Predicated region
    $region6: #{tpu_custom_call.1} parent=1 // pred_check
      _
    $region7: #{tpu_custom_call.1} parent=1 // pred_check_branch
      %18 = sbr.rel (0) target = $region9
    $region8: #{tpu_custom_call.1} parent=1 // pred_region
      %19 = dma.done [#allocation4], 128
    $region9: #{tpu_custom_call.1} parent=1 // pred_fallthru
      _
    %p20 = scmp.eq.s32.totalorder 0, 0
    // Predicated region
    $region10: #{tpu_custom_call.1} parent=1 // pred_check
      %p21 = pneg %p20
    $region11: #{tpu_custom_call.1} parent=1 // pred_check_branch
      %23 = sbr.rel (%p21) target = $region13
    $region12: #{tpu_custom_call.1} parent=1 // pred_region
      %vm24 = vcmask 7168
      %25 = vst.msk [vmem:[#allocation2] sm:$0xff] %vm24, 0.0
    $region13: #{tpu_custom_call.1} parent=1 // pred_fallthru
      _
    %v26 = vld [vmem:[#allocation2] sm:$0xff]
    %v27 = vld [vmem:[#allocation3] sm:$0xff]
    %vm28 = vcmask 130048
    %v29 = vsel %vm28, %v27, 0.0
    %30 = vadd.xlane.f32.xlu0 %v29
    %v31 = vpop.xlane.xlu0 %30
    %v32 = vadd.f32 %v26, %v31
    %vm33 = vcmask 7168
    %34 = vst.msk [vmem:[#allocation2] sm:$0xff] %vm33, %v32
    // Predicated region
    $region14: #{tpu_custom_call.1} parent=1 // pred_check
      %p35 = pneg %p20
    $region15: #{tpu_custom_call.1} parent=1 // pred_check_branch
      %37 = sbr.rel (%p35) target = $region17
    $region16: #{tpu_custom_call.1} parent=1 // pred_region
      %v38 = vld [vmem:[#allocation2] sm:$0xff]
      %v39 = vmul.f32 %v38, 0.0625
      %40 = vst.msk [vmem:[%s1] sm:$0xff] %vm33, %v39
    $region17: #{tpu_custom_call.1} parent=1 // pred_fallthru
      _
    // Predicated region
    $region18: #{tpu_custom_call.1} parent=1 // pred_check
      _
    $region19: #{tpu_custom_call.1} parent=1 // pred_check_branch
      %42 = sbr.rel (0) target = $region21
    $region20: #{tpu_custom_call.1} parent=1 // pred_region
      _
    $region21: #{tpu_custom_call.1} parent=1 // pred_fallthru
      _
    // Predicated region
    $region22: #{tpu_custom_call.1} parent=1 // pred_check
      _
    $region23: #{tpu_custom_call.1} parent=1 // pred_check_branch
      %44 = sbr.rel (0) target = $region25
    $region24: #{tpu_custom_call.1} parent=1 // pred_region
      _
    $region25: #{tpu_custom_call.1} parent=1 // pred_fallthru
      _
    %45 = vsyncpa [#allocation4], 1

</llo_original>
